<compile_context>
chip_gen: v5e
topology: v5e:2x2
jax: 0.10.0
libtpu: 0.0.40
codegen_flags: <defaults>
</compile_context>

<pallas_src>
import math

import jax
import jax.numpy as jnp
from jax.experimental import pallas as pl
from jax.experimental.pallas import tpu as pltpu


def _noisy_linear_kernel(x_ref, wmu_ref, wsig_ref, ein_ref, eout_ref,
                         bmu_ref, bsig_ref, o_ref, acc_ref):
    # x_ref   : (bm, tk)   input tile
    # w*_ref  : (tk, bn)   weight tiles, stored transposed (in, out)
    # ein_ref : (tk, 1)    factorized input noise
    # eout_ref: (1, bn)    factorized output noise (== bias_epsilon)
    # b*_ref  : (1, bn)    bias mu / sigma tiles
    # o_ref   : (bm, bn)   output tile
    # acc_ref : (bm, bn)   f32 accumulator scratch (resident across the K axis)
    k = pl.program_id(2)

    @pl.when(k == 0)
    def _():
        acc_ref[...] = jnp.zeros_like(acc_ref)

    # Rebuild the factorized-noise tile on the VPU instead of streaming a
    # materialized weight_epsilon from HBM.  Combine in f32 (safe on v5e).
    eps = ein_ref[...].astype(jnp.float32) * eout_ref[...].astype(jnp.float32)   # (tk, bn)
    w = wmu_ref[...].astype(jnp.float32) + wsig_ref[...].astype(jnp.float32) * eps
    acc_ref[...] += jnp.dot(x_ref[...], w.astype(x_ref.dtype),
                            preferred_element_type=jnp.float32)                  # single MXU op

    @pl.when(k == pl.num_programs(2) - 1)
    def _():
        b = (bmu_ref[...].astype(jnp.float32)
             + bsig_ref[...].astype(jnp.float32) * eout_ref[...].astype(jnp.float32))
        o_ref[...] = (acc_ref[...] + b).astype(o_ref.dtype)


def _round_up(x: int, m: int) -> int:
    return ((x + m - 1) // m) * m


def _sublane_align(dtype) -> int:
    return {4: 8, 2: 16, 1: 32}.get(jnp.dtype(dtype).itemsize, 8)


def _pad2(a, rows, cols):
    pr, pc = rows - a.shape[0], cols - a.shape[1]
    if pr == 0 and pc == 0:
        return a
    return jnp.pad(a, ((0, pr), (0, pc)))


def factorized_noisy_linear(x, w_mu_t, w_sigma_t, eps_in, eps_out, b_mu, b_sigma):
    """Forward pass.

    x         : (..., K)
    w_mu_t    : (K, N)  weight_mu stored transposed (one-time init layout)
    w_sigma_t : (K, N)  weight_sigma stored transposed
    eps_in    : (K,)    factorized input noise   (weight_epsilon = outer(eps_out, eps_in))
    eps_out   : (N,)    factorized output noise  (== bias_epsilon)
    b_mu      : (N,)
    b_sigma   : (N,)
    returns   : (..., N)
    """
    orig_shape = x.shape
    K = orig_shape[-1]
    N = w_mu_t.shape[1]
    x2 = x.reshape(-1, K)
    M = x2.shape[0]

    # Tile sizes: lane-aligned N/K, sublane-aligned M (16 for bf16), bounded VMEM.
    m_align = _sublane_align(x.dtype)
    bm = min(_round_up(M, m_align), 512)
    bn = min(_round_up(N, 128), 512)
    tk = min(_round_up(K, 128), 1024)
    M_pad = _round_up(M, bm)
    N_pad = _round_up(N, bn)
    K_pad = _round_up(K, tk)

    # Zero-padding keeps blocks (sublane,128)-aligned for arbitrary shapes and is
    # exact (zero rows/cols contribute nothing and are sliced off afterwards).
    x_p = _pad2(x2, M_pad, K_pad)
    wmu_p = _pad2(w_mu_t, K_pad, N_pad)
    wsig_p = _pad2(w_sigma_t, K_pad, N_pad)
    ein_p = _pad2(eps_in.reshape(K, 1), K_pad, 1)
    eout_p = _pad2(eps_out.reshape(1, N), 1, N_pad)
    bmu_p = _pad2(b_mu.reshape(1, N), 1, N_pad)
    bsig_p = _pad2(b_sigma.reshape(1, N), 1, N_pad)

    # Grid order: (N tiles, M tiles, K tiles).  Weight blocks are indexed by (k, j)
    # only, so they are not re-DMA'd across M tiles; K is the reduction ("arbitrary").
    grid = (N_pad // bn, M_pad // bm, K_pad // tk)

    out = pl.pallas_call(
        _noisy_linear_kernel,
        out_shape=jax.ShapeDtypeStruct((M_pad, N_pad), x.dtype),
        grid_spec=pltpu.PrefetchScalarGridSpec(
            num_scalar_prefetch=0,
            grid=grid,
            in_specs=[
                pl.BlockSpec((bm, tk), lambda j, i, k: (i, k)),   # x
                pl.BlockSpec((tk, bn), lambda j, i, k: (k, j)),   # weight_mu (K, N)
                pl.BlockSpec((tk, bn), lambda j, i, k: (k, j)),   # weight_sigma (K, N)
                pl.BlockSpec((tk, 1), lambda j, i, k: (k, 0)),    # eps_in
                pl.BlockSpec((1, bn), lambda j, i, k: (0, j)),    # eps_out (= bias_eps)
                pl.BlockSpec((1, bn), lambda j, i, k: (0, j)),    # bias_mu
                pl.BlockSpec((1, bn), lambda j, i, k: (0, j)),    # bias_sigma
            ],
            out_specs=pl.BlockSpec((bm, bn), lambda j, i, k: (i, j)),
            scratch_shapes=[pltpu.VMEM((bm, bn), jnp.float32)],
        ),
        compiler_params=pltpu.CompilerParams(
            dimension_semantics=("parallel", "parallel", "arbitrary"),
            vmem_limit_bytes=48 * 1024 * 1024),
    )(x_p, wmu_p, wsig_p, ein_p, eout_p, bmu_p, bsig_p)

    out = out[:M, :N]
    return out.reshape(*orig_shape[:-1], N)


def _reference(x, w_mu, w_sigma, w_eps, b_mu, b_sigma, b_eps):
    w = w_mu + w_sigma * w_eps
    b = b_mu + b_sigma * b_eps
    return jnp.matmul(x, w.T) + b


def _factorized_noise(key, size):
    # matches _get_noise: sign(n) * sqrt(|n|), n ~ N(0, 1)
    n = jax.random.normal(key, (size,), jnp.float32)
    return jnp.sign(n) * jnp.sqrt(jnp.abs(n))


if __name__ == "__main__":
    # TODO(synk): reset_parameters()/reset_noise()/disable_noise() are host-side
    # buffer management (done here in JAX); disable_noise() == passing zero eps vectors.
    batch, in_features, out_features = 8, 32, 32
    sigma_0 = 0.5
    scale = 1.0 / math.sqrt(in_features)

    key = jax.random.PRNGKey(0)
    kx, kwmu, kbmu, kein, keout = jax.random.split(key, 5)

    x = jax.random.normal(kx, (batch, in_features), jnp.float32)

    # reset_parameters():
    w_mu = jax.random.uniform(kwmu, (out_features, in_features), jnp.float32,
                              minval=-scale, maxval=scale)
    b_mu = jax.random.uniform(kbmu, (out_features,), jnp.float32,
                              minval=-scale, maxval=scale)
    w_sigma = jnp.full((out_features, in_features), sigma_0 * scale, jnp.float32)
    b_sigma = jnp.full((out_features,), sigma_0 * scale, jnp.float32)

    # reset_noise(): only the factorized vectors are needed by the kernel; the full
    # outer product is formed here solely for the reference check.
    eps_in = _factorized_noise(kein, in_features)
    eps_out = _factorized_noise(keout, out_features)

    # One-time init-layout transpose (NOT in the forward path).
    w_mu_t = jnp.transpose(w_mu)
    w_sigma_t = jnp.transpose(w_sigma)

    ref = _reference(x, w_mu, w_sigma, jnp.outer(eps_out, eps_in), b_mu, b_sigma, eps_out)

    # f32 path (exact).
    out = factorized_noisy_linear(x, w_mu_t, w_sigma_t, eps_in, eps_out, b_mu, b_sigma)
    out = jax.block_until_ready(out)
    assert out.shape == (batch, out_features)
    assert jnp.allclose(out, ref, atol=1e-5, rtol=1e-5)

    # bf16 storage path (halves HBM bytes, bf16 MXU on v6e/v7x); f32 accumulation.
    out_bf16 = factorized_noisy_linear(
        x.astype(jnp.bfloat16), w_mu_t.astype(jnp.bfloat16),
        w_sigma_t.astype(jnp.bfloat16), eps_in, eps_out, b_mu, b_sigma)
    out_bf16 = jax.block_until_ready(out_bf16)
    assert out_bf16.shape == (batch, out_features)
    assert jnp.allclose(out_bf16.astype(jnp.float32), ref, atol=3e-2, rtol=3e-2)

    print("KERNEL_OK")
</pallas_src>

<mosaic_0001>
module attributes {stable_mosaic.version = 11 : i64} {
  func.func @_noisy_linear_kernel(%arg0: i32, %arg1: i32, %arg2: i32, %arg3: memref<8x128xf32, #tpu.memory_space<vmem>>, %arg4: memref<128x128xf32, #tpu.memory_space<vmem>>, %arg5: memref<128x128xf32, #tpu.memory_space<vmem>>, %arg6: memref<128x1xf32, #tpu.memory_space<vmem>>, %arg7: memref<1x128xf32, #tpu.memory_space<vmem>>, %arg8: memref<1x128xf32, #tpu.memory_space<vmem>>, %arg9: memref<1x128xf32, #tpu.memory_space<vmem>>, %arg10: memref<8x128xf32, #tpu.memory_space<vmem>>, %arg11: memref<8x128xf32, #tpu.memory_space<vmem>>) attributes {dimension_semantics = [#tpu.dimension_semantics<parallel>, #tpu.dimension_semantics<parallel>, #tpu.dimension_semantics<arbitrary>], iteration_bounds = array<i64: 1, 1, 1>, scalar_prefetch = 0 : i64, scratch_operands = 1 : i64, tpu.core_type = #tpu.core_type<tc>, window_params = [{transform_indices = @transform_0, window_bounds = array<i64: 8, 128>}, {transform_indices = @transform_1, window_bounds = array<i64: 128, 128>}, {transform_indices = @transform_2, window_bounds = array<i64: 128, 128>}, {transform_indices = @transform_3, window_bounds = array<i64: 128, 1>}, {transform_indices = @transform_4, window_bounds = array<i64: 1, 128>}, {transform_indices = @transform_5, window_bounds = array<i64: 1, 128>}, {transform_indices = @transform_6, window_bounds = array<i64: 1, 128>}, {transform_indices = @transform_7, window_bounds = array<i64: 8, 128>}]} {
    %c0_i32 = arith.constant 0 : i32
    %0 = arith.cmpi eq, %arg2, %c0_i32 : i32
    %1 = arith.extui %0 : i1 to i32
    %c0_i32_0 = arith.constant 0 : i32
    %2 = arith.cmpi ne, %1, %c0_i32_0 : i32
    scf.if %2 {
      %cst_16 = arith.constant 0.000000e+00 : f32
      %20 = vector.broadcast %cst_16 : f32 to vector<8x128xf32>
      %c0_17 = arith.constant 0 : index
      %c0_18 = arith.constant 0 : index
      %21 = vector.load %arg11[%c0_17, %c0_18] : memref<8x128xf32, #tpu.memory_space<vmem>>, vector<8x128xf32>
      tpu.vector_store %arg11[%c0_17, %c0_18], %20 {strides = array<i32>} : memref<8x128xf32, #tpu.memory_space<vmem>>, vector<8x128xf32>,
    } else {
    }
    %c0 = arith.constant 0 : index
    %c0_1 = arith.constant 0 : index
    %3 = vector.load %arg6[%c0, %c0_1] : memref<128x1xf32, #tpu.memory_space<vmem>>, vector<128x1xf32>
    %c0_2 = arith.constant 0 : index
    %c0_3 = arith.constant 0 : index
    %4 = vector.load %arg7[%c0_2, %c0_3] : memref<1x128xf32, #tpu.memory_space<vmem>>, vector<1x128xf32>
    %5 = vector.broadcast %3 : vector<128x1xf32> to vector<128x128xf32>
    %6 = vector.broadcast %4 : vector<1x128xf32> to vector<128x128xf32>
    %7 = arith.mulf %5, %6 : vector<128x128xf32>
    %c0_4 = arith.constant 0 : index
    %c0_5 = arith.constant 0 : index
    %8 = vector.load %arg4[%c0_4, %c0_5] : memref<128x128xf32, #tpu.memory_space<vmem>>, vector<128x128xf32>
    %c0_6 = arith.constant 0 : index
    %c0_7 = arith.constant 0 : index
    %9 = vector.load %arg5[%c0_6, %c0_7] : memref<128x128xf32, #tpu.memory_space<vmem>>, vector<128x128xf32>
    %10 = arith.mulf %9, %7 : vector<128x128xf32>
    %11 = arith.addf %8, %10 : vector<128x128xf32>
    %c0_8 = arith.constant 0 : index
    %c0_9 = arith.constant 0 : index
    %12 = vector.load %arg11[%c0_8, %c0_9] : memref<8x128xf32, #tpu.memory_space<vmem>>, vector<8x128xf32>
    %c0_10 = arith.constant 0 : index
    %c0_11 = arith.constant 0 : index
    %13 = vector.load %arg3[%c0_10, %c0_11] : memref<8x128xf32, #tpu.memory_space<vmem>>, vector<8x128xf32>
    %cst = arith.constant dense<0.000000e+00> : vector<8x128xf32>
    %14 = tpu.matmul %13, %11, %cst {dimension_numbers = #tpu.dot_dimension_numbers<[1], [0], [0], [1], [0, 0, 1, 1], [], []>} : vector<8x128xf32>, vector<128x128xf32>, vector<8x128xf32> -> vector<8x128xf32>
    %15 = arith.addf %12, %14 : vector<8x128xf32>
    %c0_12 = arith.constant 0 : index
    %c0_13 = arith.constant 0 : index
    %16 = vector.load %arg11[%c0_12, %c0_13] : memref<8x128xf32, #tpu.memory_space<vmem>>, vector<8x128xf32>
    tpu.vector_store %arg11[%c0_12, %c0_13], %15 {strides = array<i32>} : memref<8x128xf32, #tpu.memory_space<vmem>>, vector<8x128xf32>,
    %c0_i32_14 = arith.constant 0 : i32
    %17 = arith.cmpi eq, %arg2, %c0_i32_14 : i32
    %18 = arith.extui %17 : i1 to i32
    %c0_i32_15 = arith.constant 0 : i32
    %19 = arith.cmpi ne, %18, %c0_i32_15 : i32
    scf.if %19 {
      %c0_16 = arith.constant 0 : index
      %c0_17 = arith.constant 0 : index
      %20 = vector.load %arg8[%c0_16, %c0_17] : memref<1x128xf32, #tpu.memory_space<vmem>>, vector<1x128xf32>
      %c0_18 = arith.constant 0 : index
      %c0_19 = arith.constant 0 : index
      %21 = vector.load %arg9[%c0_18, %c0_19] : memref<1x128xf32, #tpu.memory_space<vmem>>, vector<1x128xf32>
      %c0_20 = arith.constant 0 : index
      %c0_21 = arith.constant 0 : index
      %22 = vector.load %arg7[%c0_20, %c0_21] : memref<1x128xf32, #tpu.memory_space<vmem>>, vector<1x128xf32>
      %23 = arith.mulf %21, %22 : vector<1x128xf32>
      %24 = arith.addf %20, %23 : vector<1x128xf32>
      %c0_22 = arith.constant 0 : index
      %c0_23 = arith.constant 0 : index
      %25 = vector.load %arg11[%c0_22, %c0_23] : memref<8x128xf32, #tpu.memory_space<vmem>>, vector<8x128xf32>
      %26 = vector.broadcast %24 : vector<1x128xf32> to vector<8x128xf32>
      %27 = arith.addf %25, %26 : vector<8x128xf32>
      %c0_24 = arith.constant 0 : index
      %c0_25 = arith.constant 0 : index
      %28 = vector.load %arg10[%c0_24, %c0_25] : memref<8x128xf32, #tpu.memory_space<vmem>>, vector<8x128xf32>
      tpu.vector_store %arg10[%c0_24, %c0_25], %27 {strides = array<i32>} : memref<8x128xf32, #tpu.memory_space<vmem>>, vector<8x128xf32>,
    } else {
    }
    return
  }
  func.func @transform_0(%arg0: i32, %arg1: i32, %arg2: i32) -> (i32, i32) {
    %c0_i32 = arith.constant 0 : i32
    return %arg1, %arg2 : i32, i32
  }
  func.func @transform_1(%arg0: i32, %arg1: i32, %arg2: i32) -> (i32, i32) {
    %c0_i32 = arith.constant 0 : i32
    return %arg2, %arg0 : i32, i32
  }
  func.func @transform_2(%arg0: i32, %arg1: i32, %arg2: i32) -> (i32, i32) {
    %c0_i32 = arith.constant 0 : i32
    return %arg2, %arg0 : i32, i32
  }
  func.func @transform_3(%arg0: i32, %arg1: i32, %arg2: i32) -> (i32, i32) {
    %c0_i32 = arith.constant 0 : i32
    %c0_i32_0 = arith.constant 0 : i32
    return %arg2, %c0_i32 : i32, i32
  }
  func.func @transform_4(%arg0: i32, %arg1: i32, %arg2: i32) -> (i32, i32) {
    %c0_i32 = arith.constant 0 : i32
    %c0_i32_0 = arith.constant 0 : i32
    return %c0_i32, %arg0 : i32, i32
  }
  func.func @transform_5(%arg0: i32, %arg1: i32, %arg2: i32) -> (i32, i32) {
    %c0_i32 = arith.constant 0 : i32
    %c0_i32_0 = arith.constant 0 : i32
    return %c0_i32, %arg0 : i32, i32
  }
  func.func @transform_6(%arg0: i32, %arg1: i32, %arg2: i32) -> (i32, i32) {
    %c0_i32 = arith.constant 0 : i32
    %c0_i32_0 = arith.constant 0 : i32
    return %c0_i32, %arg0 : i32, i32
  }
  func.func @transform_7(%arg0: i32, %arg1: i32, %arg2: i32) -> (i32, i32) {
    %c0_i32 = arith.constant 0 : i32
    return %arg1, %arg0 : i32, i32
  }
}

</mosaic_0001>

<llo_original>
// kernel: tpu_custom_call.1
$region0: #{tpu_custom_call.1}
  #allocation0 [shape = 'u32[]', space=smem, size = 0x4, offset = 0x4, fixed_abs, tag = 'smem constant byte address 0x4 - core index']
  #allocation1 [shape = 'u32[72,128]{1,0:T(1,128)}', space=vmem, size = 0x9000, scoped, tag = 'internal scratch']
  #allocation2 [shape = 'f32[8,128]{1,0:T(8,128)}', space=vmem, size = 0x1000, scoped, tag = 'scratch operand']
  %s0 = inlined_call_operand.hbm [shape: f32[8,128], index: 0, kind: input, shape index: {}]
  %s1 = inlined_call_operand.vmem [shape: f32[128,128], index: 1, kind: input, shape index: {}]
  %s2 = inlined_call_operand.hbm [shape: f32[128,128], index: 2, kind: input, shape index: {}]
  %s3 = inlined_call_operand.vmem [shape: f32[128,1], index: 3, kind: input, shape index: {}]
  %s4 = inlined_call_operand.vmem [shape: f32[1,128], index: 4, kind: input, shape index: {}]
  %s5 = inlined_call_operand.vmem [shape: f32[1,128], index: 5, kind: input, shape index: {}]
  %s6 = inlined_call_operand.vmem [shape: f32[1,128], index: 6, kind: input, shape index: {}]
  %s7 = inlined_call_operand.hbm [shape: f32[8,128], index: 7, kind: output, shape index: {}]
  %s8 = sld [smem:[#allocation0]]
  $region54: #{tpu_custom_call.1} parent=0
    _
  %s10 = ssub.s32 1, %s8
  %s11 = scalar_select 0, %s10, %s8
  $region1: #{tpu_custom_call.1} parent=0
    #allocation3 [shape = 'u8[4096]{0}', space=vmem, size = 0x1000, scoped, tag = 'input window, operand 0, single buffered']
    #allocation4 [shape = 's32[1]{0}', space=sflag, size = 0x4, scoped, tag = 'scoped memory for tpu_custom_call.1']
    #allocation5 [shape = 's32[1]{0}', space=sflag, size = 0x4, scoped, tag = 'scoped memory for tpu_custom_call.1']
    #allocation6 [shape = 'u8[65536]{0}', space=vmem, size = 0x10000, scoped, tag = 'input window, operand 2, single buffered']
    #allocation7 [shape = 's32[1]{0}', space=sflag, size = 0x4, scoped, tag = 'scoped memory for tpu_custom_call.1']
    #allocation8 [shape = 'u8[4096]{0}', space=vmem, size = 0x1000, scoped, tag = 'output window, operand 0, single buffered']
    %12 = vsyncpa [#allocation4], 0
    %13 = vsyncpa [#allocation7], 0
    %14 = vsyncpa [#allocation5], 0
    // Predicated region
    $region2: #{tpu_custom_call.1} parent=1 // pred_check
      _
    $region3: #{tpu_custom_call.1} parent=1 // pred_check_branch
      %16 = sbr.rel (0) target = $region5
    $region4: #{tpu_custom_call.1} parent=1 // pred_region
      %18 = vsyncadd [#allocation4], 0
      %s20 = sshll.u32 %s0, 4
      %s21 = int_to_ptr.hbm [resolvable:$true] %s20
      %s22 = sshll.u32 [#allocation3], 4
      %s23 = int_to_ptr.vmem [resolvable:$true] %s22
      %25 = dma.hbm_to_vmem [thread:$0]  %s21, 128, %s23, [#allocation4]
    $region5: #{tpu_custom_call.1} parent=1 // pred_fallthru
      _
    // Predicated region
    $region6: #{tpu_custom_call.1} parent=1 // pred_check
      _
    $region7: #{tpu_custom_call.1} parent=1 // pred_check_branch
      %27 = sbr.rel (0) target = $region9
    $region8: #{tpu_custom_call.1} parent=1 // pred_region
      _
    $region9: #{tpu_custom_call.1} parent=1 // pred_fallthru
      _
    // Predicated region
    $region10: #{tpu_custom_call.1} parent=1 // pred_check
      _
    $region11: #{tpu_custom_call.1} parent=1 // pred_check_branch
      %29 = sbr.rel (0) target = $region13
    $region12: #{tpu_custom_call.1} parent=1 // pred_region
      %31 = vsyncadd [#allocation7], 0
      %s32 = sshll.u32 %s2, 4
      %s33 = int_to_ptr.hbm [resolvable:$true] %s32
      %s34 = sshll.u32 [#allocation6], 4
      %s35 = int_to_ptr.vmem [resolvable:$true] %s34
      %40 = dma.hbm_to_vmem [thread:$0]  %s33, 2048, %s35, [#allocation7], 128, 128, 8
    $region13: #{tpu_custom_call.1} parent=1 // pred_fallthru
      _
    // Predicated region
    $region14: #{tpu_custom_call.1} parent=1 // pred_check
      _
    $region15: #{tpu_custom_call.1} parent=1 // pred_check_branch
      %42 = sbr.rel (0) target = $region17
    $region16: #{tpu_custom_call.1} parent=1 // pred_region
      _
    $region17: #{tpu_custom_call.1} parent=1 // pred_fallthru
      _
    // Predicated region
    $region18: #{tpu_custom_call.1} parent=1 // pred_check
      _
    $region19: #{tpu_custom_call.1} parent=1 // pred_check_branch
      %44 = sbr.rel (0) target = $region21
    $region20: #{tpu_custom_call.1} parent=1 // pred_region
      _
    $region21: #{tpu_custom_call.1} parent=1 // pred_fallthru
      _
    // Predicated region
    $region22: #{tpu_custom_call.1} parent=1 // pred_check
      _
    $region23: #{tpu_custom_call.1} parent=1 // pred_check_branch
      %46 = sbr.rel (0) target = $region25
    $region24: #{tpu_custom_call.1} parent=1 // pred_region
      _
    $region25: #{tpu_custom_call.1} parent=1 // pred_fallthru
      _
    // Predicated region
    $region26: #{tpu_custom_call.1} parent=1 // pred_check
      _
    $region27: #{tpu_custom_call.1} parent=1 // pred_check_branch
      %48 = sbr.rel (0) target = $region29
    $region28: #{tpu_custom_call.1} parent=1 // pred_region
      _
    $region29: #{tpu_custom_call.1} parent=1 // pred_fallthru
      _
    // Predicated region
    $region30: #{tpu_custom_call.1} parent=1 // pred_check
      _
    $region31: #{tpu_custom_call.1} parent=1 // pred_check_branch
      %50 = sbr.rel (0) target = $region33
    $region32: #{tpu_custom_call.1} parent=1 // pred_region
      %52 = dma.done [#allocation4], 128
    $region33: #{tpu_custom_call.1} parent=1 // pred_fallthru
      _
    // Predicated region
    $region34: #{tpu_custom_call.1} parent=1 // pred_check
      _
    $region35: #{tpu_custom_call.1} parent=1 // pred_check_branch
      %54 = sbr.rel (0) target = $region37
    $region36: #{tpu_custom_call.1} parent=1 // pred_region
      %56 = dma.done [#allocation7], 2048
    $region37: #{tpu_custom_call.1} parent=1 // pred_fallthru
      _
    %p57 = scmp.eq.s32.totalorder 0, 0
    // Predicated region
    $region38: #{tpu_custom_call.1} parent=1 // pred_check
      %p58 = pneg %p57
    $region39: #{tpu_custom_call.1} parent=1 // pred_check_branch
      %60 = sbr.rel (%p58) target = $region41
    $region40: #{tpu_custom_call.1} parent=1 // pred_region
      %61 = vst [vmem:[#allocation2] sm:$0xff] 0.0
    $region41: #{tpu_custom_call.1} parent=1 // pred_fallthru
      _
    %v62 = vld [vmem:[%s3] sm:$0xff]
    %v63 = vld [vmem:[%s3 + $0x8] sm:$0xff]
    %v64 = vld [vmem:[%s3 + $0x10] sm:$0xff]
    %v65 = vld [vmem:[%s3 + $0x18] sm:$0xff]
    %v66 = vld [vmem:[%s3 + $0x20] sm:$0xff]
    %v67 = vld [vmem:[%s3 + $0x28] sm:$0xff]
    %v68 = vld [vmem:[%s3 + $0x30] sm:$0xff]
    %v69 = vld [vmem:[%s3 + $0x38] sm:$0xff]
    %v70 = vld [vmem:[%s3 + $0x40] sm:$0xff]
    %v71 = vld [vmem:[%s3 + $0x48] sm:$0xff]
    %v72 = vld [vmem:[%s3 + $0x50] sm:$0xff]
    %v73 = vld [vmem:[%s3 + $0x58] sm:$0xff]
    %v74 = vld [vmem:[%s3 + $0x60] sm:$0xff]
    %v75 = vld [vmem:[%s3 + $0x68] sm:$0xff]
    %v76 = vld [vmem:[%s3 + $0x70] sm:$0xff]
    %v77 = vld [vmem:[%s3 + $0x78] sm:$0xff]
    %v78 = vld [vmem:[%s4] sm:$0x1]
    %80 = vset.pattern.permute.xlu0 0
    %81 = vperm.xlu0 %80, %v62
    %v82 = vpop.permute.xlu0 %81
    %85 = vset.pattern.permute.xlu0 0
    %86 = vperm.xlu0 %85, %v63
    %v87 = vpop.permute.xlu0 %86
    %90 = vset.pattern.permute.xlu0 0
    %91 = vperm.xlu0 %90, %v64
    %v92 = vpop.permute.xlu0 %91
    %95 = vset.pattern.permute.xlu0 0
    %96 = vperm.xlu0 %95, %v65
    %v97 = vpop.permute.xlu0 %96
    %100 = vset.pattern.permute.xlu0 0
    %101 = vperm.xlu0 %100, %v66
    %v102 = vpop.permute.xlu0 %101
    %105 = vset.pattern.permute.xlu0 0
    %106 = vperm.xlu0 %105, %v67
    %v107 = vpop.permute.xlu0 %106
    %110 = vset.pattern.permute.xlu0 0
    %111 = vperm.xlu0 %110, %v68
    %v112 = vpop.permute.xlu0 %111
    %115 = vset.pattern.permute.xlu0 0
    %116 = vperm.xlu0 %115, %v69
    %v117 = vpop.permute.xlu0 %116
    %120 = vset.pattern.permute.xlu0 0
    %121 = vperm.xlu0 %120, %v70
    %v122 = vpop.permute.xlu0 %121
    %125 = vset.pattern.permute.xlu0 0
    %126 = vperm.xlu0 %125, %v71
    %v127 = vpop.permute.xlu0 %126
    %130 = vset.pattern.permute.xlu0 0
    %131 = vperm.xlu0 %130, %v72
    %v132 = vpop.permute.xlu0 %131
    %135 = vset.pattern.permute.xlu0 0
    %136 = vperm.xlu0 %135, %v73
    %v137 = vpop.permute.xlu0 %136
    %140 = vset.pattern.permute.xlu0 0
    %141 = vperm.xlu0 %140, %v74
    %v142 = vpop.permute.xlu0 %141
    %145 = vset.pattern.permute.xlu0 0
    %146 = vperm.xlu0 %145, %v75
    %v147 = vpop.permute.xlu0 %146
    %150 = vset.pattern.permute.xlu0 0
    %151 = vperm.xlu0 %150, %v76
    %v152 = vpop.permute.xlu0 %151
    %155 = vset.pattern.permute.xlu0 0
    %156 = vperm.xlu0 %155, %v77
    %v157 = vpop.permute.xlu0 %156
    %v160 = vperm.slane %v78, 0
    %v162 = vmul.f32 %v82, %v160
    %v163 = vmul.f32 %v87, %v160
    %v164 = vmul.f32 %v92, %v160
    %v165 = vmul.f32 %v97, %v160
    %v166 = vmul.f32 %v102, %v160
    %v167 = vmul.f32 %v107, %v160
    %v168 = vmul.f32 %v112, %v160
    %v169 = vmul.f32 %v117, %v160
    %v170 = vmul.f32 %v122, %v160
    %v171 = vmul.f32 %v127, %v160
    %v172 = vmul.f32 %v132, %v160
    %v173 = vmul.f32 %v137, %v160
    %v174 = vmul.f32 %v142, %v160
    %v175 = vmul.f32 %v147, %v160
    %v176 = vmul.f32 %v152, %v160
    %v177 = vmul.f32 %v157, %v160
    %v178 = vld [vmem:[%s1] sm:$0xff]
    %v179 = vld [vmem:[%s1 + $0x8] sm:$0xff]
    %v180 = vld [vmem:[%s1 + $0x10] sm:$0xff]
    %v181 = vld [vmem:[%s1 + $0x18] sm:$0xff]
    %v182 = vld [vmem:[%s1 + $0x20] sm:$0xff]
    %v183 = vld [vmem:[%s1 + $0x28] sm:$0xff]
    %v184 = vld [vmem:[%s1 + $0x30] sm:$0xff]
    %v185 = vld [vmem:[%s1 + $0x38] sm:$0xff]
    %v186 = vld [vmem:[%s1 + $0x40] sm:$0xff]
    %v187 = vld [vmem:[%s1 + $0x48] sm:$0xff]
    %v188 = vld [vmem:[%s1 + $0x50] sm:$0xff]
    %v189 = vld [vmem:[%s1 + $0x58] sm:$0xff]
    %v190 = vld [vmem:[%s1 + $0x60] sm:$0xff]
    %v191 = vld [vmem:[%s1 + $0x68] sm:$0xff]
    %v192 = vld [vmem:[%s1 + $0x70] sm:$0xff]
    %v193 = vld [vmem:[%s1 + $0x78] sm:$0xff]
    %v194 = vld [vmem:[#allocation6] sm:$0xff]
    %v195 = vld [vmem:[#allocation6 + $0x8] sm:$0xff]
    %v196 = vld [vmem:[#allocation6 + $0x10] sm:$0xff]
    %v197 = vld [vmem:[#allocation6 + $0x18] sm:$0xff]
    %v198 = vld [vmem:[#allocation6 + $0x20] sm:$0xff]
    %v199 = vld [vmem:[#allocation6 + $0x28] sm:$0xff]
    %v200 = vld [vmem:[#allocation6 + $0x30] sm:$0xff]
    %v201 = vld [vmem:[#allocation6 + $0x38] sm:$0xff]
    %v202 = vld [vmem:[#allocation6 + $0x40] sm:$0xff]
    %v203 = vld [vmem:[#allocation6 + $0x48] sm:$0xff]
    %v204 = vld [vmem:[#allocation6 + $0x50] sm:$0xff]
    %v205 = vld [vmem:[#allocation6 + $0x58] sm:$0xff]
    %v206 = vld [vmem:[#allocation6 + $0x60] sm:$0xff]
    %v207 = vld [vmem:[#allocation6 + $0x68] sm:$0xff]
    %v208 = vld [vmem:[#allocation6 + $0x70] sm:$0xff]
    %v209 = vld [vmem:[#allocation6 + $0x78] sm:$0xff]
    %v210 = vmul.f32 %v194, %v162
    %v211 = vmul.f32 %v195, %v163
    %v212 = vmul.f32 %v196, %v164
    %v213 = vmul.f32 %v197, %v165
    %v214 = vmul.f32 %v198, %v166
    %v215 = vmul.f32 %v199, %v167
    %v216 = vmul.f32 %v200, %v168
    %v217 = vmul.f32 %v201, %v169
    %v218 = vmul.f32 %v202, %v170
    %v219 = vmul.f32 %v203, %v171
    %v220 = vmul.f32 %v204, %v172
    %v221 = vmul.f32 %v205, %v173
    %v222 = vmul.f32 %v206, %v174
    %v223 = vmul.f32 %v207, %v175
    %v224 = vmul.f32 %v208, %v176
    %v225 = vmul.f32 %v209, %v177
    %v226 = vadd.f32 %v178, %v210
    %v227 = vadd.f32 %v179, %v211
    %v228 = vadd.f32 %v180, %v212
    %v229 = vadd.f32 %v181, %v213
    %v230 = vadd.f32 %v182, %v214
    %v231 = vadd.f32 %v183, %v215
    %v232 = vadd.f32 %v184, %v216
    %v233 = vadd.f32 %v185, %v217
    %v234 = vadd.f32 %v186, %v218
    %v235 = vadd.f32 %v187, %v219
    %v236 = vadd.f32 %v188, %v220
    %v237 = vadd.f32 %v189, %v221
    %v238 = vadd.f32 %v190, %v222
    %v239 = vadd.f32 %v191, %v223
    %v240 = vadd.f32 %v192, %v224
    %v241 = vadd.f32 %v193, %v225
    %v242 = vld [vmem:[#allocation2] sm:$0xff]
    %v243 = vld [vmem:[#allocation3] sm:$0xff]
    %244 = vmatpush.msra.mxu0 %v241
    %245 = vmatpush.msra.mxu0 %v240
    %246 = vmatpush.msra.mxu0 %v239
    %247 = vmatpush.msra.mxu0 %v238
    %248 = vmatpush.msra.mxu0 %v237
    %249 = vmatpush.msra.mxu0 %v236
    %250 = vmatpush.msra.mxu0 %v235
    %251 = vmatpush.msra.mxu0 %v234
    %252 = vmatpush.msra.mxu0 %v233
    %253 = vmatpush.msra.mxu0 %v232
    %254 = vmatpush.msra.mxu0 %v231
    %255 = vmatpush.msra.mxu0 %v230
    %256 = vmatpush.msra.mxu0 %v229
    %257 = vmatpush.msra.mxu0 %v228
    %258 = vmatpush.msra.mxu0 %v227
    %259 = vmatpush.msra.mxu0 %v226
    %260 = vmatmul.f32.gmra.mxu0 %v243
    %v261 = vpop.f32.mrf.mxu0
    %v262 = vadd.f32 0.0, %v261
    %263 = vdwg.mxu0
    %v264 = vadd.f32 %v242, %v262
    %265 = vst [vmem:[#allocation2] sm:$0xff] %v264
    // Predicated region
    $region42: #{tpu_custom_call.1} parent=1 // pred_check
      %p266 = pneg %p57
    $region43: #{tpu_custom_call.1} parent=1 // pred_check_branch
      %268 = sbr.rel (%p266) target = $region45
    $region44: #{tpu_custom_call.1} parent=1 // pred_region
      %v269 = vld [vmem:[%s5] sm:$0x1]
      %v270 = vld [vmem:[%s6] sm:$0x1]
      %v271 = vld [vmem:[%s4] sm:$0x1]
      %v272 = vmul.f32 %v270, %v271
      %v273 = vadd.f32 %v269, %v272
      %v274 = vld [vmem:[#allocation2] sm:$0xff]
      %v276 = vperm.slane %v273, 0
      %v278 = vadd.f32 %v274, %v276
      %279 = vst [vmem:[#allocation8] sm:$0xff] %v278
    $region45: #{tpu_custom_call.1} parent=1 // pred_fallthru
      _
    // Predicated region
    $region46: #{tpu_custom_call.1} parent=1 // pred_check
      _
    $region47: #{tpu_custom_call.1} parent=1 // pred_check_branch
      %281 = sbr.rel (0) target = $region49
    $region48: #{tpu_custom_call.1} parent=1 // pred_region
      %283 = vsyncadd [#allocation5], 0
      %s285 = sshll.u32 [#allocation8], 4
      %s286 = int_to_ptr.vmem [resolvable:$true] %s285
      %s287 = sshll.u32 %s7, 4
      %s288 = int_to_ptr.hbm [resolvable:$true] %s287
      %290 = dma.vmem_to_hbm [thread:$0]  %s286, 128, %s288, [#allocation5]
    $region49: #{tpu_custom_call.1} parent=1 // pred_fallthru
      _
    // Predicated region
    $region50: #{tpu_custom_call.1} parent=1 // pred_check
      _
    $region51: #{tpu_custom_call.1} parent=1 // pred_check_branch
      %292 = sbr.rel (0) target = $region53
    $region52: #{tpu_custom_call.1} parent=1 // pred_region
      %294 = dma.done [#allocation5], 128
    $region53: #{tpu_custom_call.1} parent=1 // pred_fallthru
      _
    %295 = vsyncpa [#allocation4], 1
    %296 = vsyncpa [#allocation7], 1
    %297 = vsyncpa [#allocation5], 1

</llo_original>
